<compile_context>
chip_gen: v7x
topology: tpu7x:2x2x1
jax: 0.10.0
libtpu: 0.0.40
codegen_flags: <defaults>
</compile_context>

<pallas_src>
import numpy as np
import jax
import jax.numpy as jnp
from jax import lax
from jax.experimental import pallas as pl
from jax.experimental.pallas import tpu as pltpu


# --------------------------------------------------------------------------- #
# Per-generation configuration
# --------------------------------------------------------------------------- #
def _hw_config():
    """Tile / VMEM-limit defaults keyed off the TensorCore VMEM capacity."""
    try:
        vmem = int(pltpu.get_tpu_info().vmem_capacity_bytes)
    except Exception:
        vmem = None
    if vmem is not None and vmem >= 100 * 1024 * 1024:
        # v5e / v6e: 128 MiB VMEM, single TensorCore per chip -> big tiles.
        return dict(vmem_limit=96 * 1024 * 1024, tm=1024, t_k=1024,
                    t_out=4096, multi_core=False)
    # v7x (64 MiB VMEM, 2 TCs per chip) or unknown: conservative tiles,
    # make sure both TensorCores get work along "parallel" axes.
    return dict(vmem_limit=40 * 1024 * 1024, tm=512, t_k=1024,
                t_out=2048, multi_core=True)


# --------------------------------------------------------------------------- #
# Kernels
# --------------------------------------------------------------------------- #
def _encoder_kernel(x_ref, wq1_ref, bq1_ref,
                    wmu_ref, bmu_ref, wlv_ref, blv_ref,
                    wp1_ref, bp1_ref,
                    mu_ref, logvar_ref, d_ref,
                    acc_ref, sq_ref):
    """Grid = (batch tiles, n_items K-tiles).  K axis accumulates layer 1."""
    k = pl.program_id(1)

    @pl.when(k == 0)
    def _():
        acc_ref[...] = jnp.zeros_like(acc_ref)
        sq_ref[...] = jnp.zeros_like(sq_ref)

    x = x_ref[...]                        # activation dtype (f32 or bf16)

    # Accumulate lane-wide partial squared row norms in f32 (deferred L2
    # normalize): no cross-lane reduce / masked 1-lane store inside the K loop.
    xf = x.astype(jnp.float32)
    x2 = xf * xf
    partial = sq_ref[...]
    for c in range(x2.shape[1] // 128):   # static unroll, lane-aligned slices
        partial = partial + x2[:, c * 128:(c + 1) * 128]
    sq_ref[...] = partial

    # Accumulate un-normalized layer-1 pre-activation on the MXU (f32 acc).
    acc_ref[...] += jnp.dot(x.astype(wq1_ref.dtype), wq1_ref[...],
                            preferred_element_type=jnp.float32)

    @pl.when(k == pl.num_programs(1) - 1)
    def _():
        # Single cross-lane reduce of the lane-wide partial sums.
        sq = jnp.sum(sq_ref[...], axis=-1, keepdims=True)
        # Deferred normalize: (x/||x||) @ W == (x @ W) * (1/max(||x||, 1e-12)).
        inv_norm = lax.rsqrt(jnp.maximum(sq, 1e-24))
        h = jnp.tanh(acc_ref[...] * inv_norm + bq1_ref[...])          # f32
        hc = h.astype(wmu_ref.dtype)

        # Pre-split (mu | logvar) head: both outputs lane-aligned.
        mu = jnp.dot(hc, wmu_ref[...],
                     preferred_element_type=jnp.float32) + bmu_ref[...]
        logvar = jnp.dot(hc, wlv_ref[...],
                         preferred_element_type=jnp.float32) + blv_ref[...]

        # Eval-mode reparameterize: z = mu.  Decoder layer 1 fused here.
        d = jnp.tanh(jnp.dot(mu.astype(wp1_ref.dtype), wp1_ref[...],
                             preferred_element_type=jnp.float32) + bp1_ref[...])

        mu_ref[...] = mu.astype(mu_ref.dtype)
        logvar_ref[...] = logvar.astype(logvar_ref.dtype)
        d_ref[...] = d.astype(d_ref.dtype)


def _decoder_kernel(d_ref, wp2_ref, bp2_ref, recon_ref):
    """Grid = (n_items N-tiles, batch tiles): wp2 tile fetched once per N-tile."""
    recon = jnp.dot(d_ref[...].astype(wp2_ref.dtype), wp2_ref[...],
                    preferred_element_type=jnp.float32) + bp2_ref[...]
    recon_ref[...] = recon.astype(recon_ref.dtype)


# --------------------------------------------------------------------------- #
# Wrapper
# --------------------------------------------------------------------------- #
def _round_up(n, m):
    return ((n + m - 1) // m) * m


def _pad2(a, shape):
    return jnp.pad(a, ((0, shape[0] - a.shape[0]), (0, shape[1] - a.shape[1])))


def multivae_forward(x, params, *, tm=None, t_k=None, t_out=None,
                     recon_dtype=None):
    """x: [B, n_items] float32.  params: dict of pre-transposed weights/biases.

    tm:    batch tile (rows per MXU push); default per-generation, clamped.
    t_k:   K tile along n_items for wq1 streaming in kernel 1; multiple of 128.
    t_out: output-N tile along n_items for wp2/recon in kernel 2 (decoupled
           from t_k); multiple of 128.
    recon_dtype: dtype of recon output (default f32; pass bf16 to halve its
           writeback if the consumer tolerates it).
    """
    cfg = _hw_config()
    f32 = jnp.float32
    if tm is None:
        tm = cfg["tm"]
    if t_k is None:
        t_k = cfg["t_k"]
    if t_out is None:
        t_out = cfg["t_out"]
    recon_dtype = f32 if recon_dtype is None else recon_dtype

    B, n_items = x.shape
    hidden = params["wq1"].shape[1]
    latent = params["wp1"].shape[0]
    assert params["wq2"].shape[1] == 2 * latent
    wdtype = params["wq1"].dtype
    w_isize = jnp.dtype(wdtype).itemsize
    # bf16 weights => store the n_items-sized activations (x, d) in bf16 too;
    # squared-norm accumulation and all intermediates stay f32.
    act_dtype = wdtype if wdtype != f32 else f32
    a_isize = jnp.dtype(act_dtype).itemsize

    # ---- padded / tiled geometry ------------------------------------------
    Bp = _round_up(B, 8)
    tm = max(8, (min(tm, Bp) // 8) * 8)
    if cfg["multi_core"] and Bp >= 16:
        # v7x: >=2 batch tiles so both TensorCores get work on the parallel axis.
        tm = min(tm, max(8, ((Bp // 2) // 8) * 8))
    Bp = _round_up(Bp, tm)

    n128 = _round_up(n_items, 128)
    t_k = min(t_k, n128)
    assert t_k % 128 == 0
    t_out = min(t_out, n128)
    if cfg["multi_core"] and n128 >= 256:
        # v7x: >=2 output-N tiles in kernel 2.
        t_out = min(t_out, max(128, ((n128 // 2) // 128) * 128))
    assert t_out % 128 == 0

    N1 = _round_up(n_items, t_k)     # kernel-1 padding (K streaming of wq1)
    N2 = _round_up(n_items, t_out)   # kernel-2 padding (N streaming of wp2)
    H = _round_up(hidden, 128)
    L = _round_up(latent, 128)

    # ---- zero-padded operands (exact: padding contributes zeros) -----------
    x_p = _pad2(x.astype(f32), (Bp, N1)).astype(act_dtype)
    wq1 = _pad2(params["wq1"], (N1, H))
    bq1 = _pad2(params["bq1"].astype(f32), (1, H))
    wmu = _pad2(params["wq2"][:, :latent], (H, L))
    wlv = _pad2(params["wq2"][:, latent:], (H, L))
    bmu = _pad2(params["bq2"][:, :latent].astype(f32), (1, L))
    blv = _pad2(params["bq2"][:, latent:].astype(f32), (1, L))
    wp1 = _pad2(params["wp1"], (L, H))
    bp1 = _pad2(params["bp1"].astype(f32), (1, H))
    wp2 = _pad2(params["wp2"], (H, N2))
    bp2 = _pad2(params["bp2"].astype(f32), (1, N2))

    # ---- kernel 1: encoder + decoder layer 1 --------------------------------
    n_btiles = Bp // tm
    grid1 = (n_btiles, N1 // t_k)   # reduction axis (n_items) last
    flops1 = 2 * Bp * (N1 * H + 2 * H * L + L * H)
    bytes1 = int(x_p.size * a_isize
                 + n_btiles * wq1.size * w_isize            # re-streamed per batch tile
                 + (wmu.size + wlv.size + wp1.size) * w_isize
                 + (bq1.size + bmu.size + blv.size + bp1.size) * 4
                 + 2 * Bp * L * 4 + Bp * H * a_isize)

    mu_p, logvar_p, d_p = pl.pallas_call(
        _encoder_kernel,
        out_shape=(jax.ShapeDtypeStruct((Bp, L), f32),
                   jax.ShapeDtypeStruct((Bp, L), f32),
                   jax.ShapeDtypeStruct((Bp, H), act_dtype)),
        grid_spec=pltpu.PrefetchScalarGridSpec(
            num_scalar_prefetch=0,
            grid=grid1,
            in_specs=[
                pl.BlockSpec((tm, t_k), lambda i, k: (i, k)),       # x
                pl.BlockSpec((t_k, H), lambda i, k: (k, 0)),        # wq1 (stream K)
                pl.BlockSpec((1, H), lambda i, k: (0, 0)),          # bq1
                pl.BlockSpec((H, L), lambda i, k: (0, 0)),          # wq2 mu head
                pl.BlockSpec((1, L), lambda i, k: (0, 0)),          # bq2 mu head
                pl.BlockSpec((H, L), lambda i, k: (0, 0)),          # wq2 logvar head
                pl.BlockSpec((1, L), lambda i, k: (0, 0)),          # bq2 logvar head
                pl.BlockSpec((L, H), lambda i, k: (0, 0)),          # wp1
                pl.BlockSpec((1, H), lambda i, k: (0, 0)),          # bp1
            ],
            out_specs=[
                pl.BlockSpec((tm, L), lambda i, k: (i, 0)),         # mu
                pl.BlockSpec((tm, L), lambda i, k: (i, 0)),         # logvar
                pl.BlockSpec((tm, H), lambda i, k: (i, 0)),         # d
            ],
            scratch_shapes=[pltpu.VMEM((tm, H), f32),               # layer-1 acc
                            pltpu.VMEM((tm, 128), f32)],            # sum(x^2) partials
        ),
        compiler_params=pltpu.CompilerParams(
            dimension_semantics=("parallel", "arbitrary"),
            vmem_limit_bytes=cfg["vmem_limit"]),
        cost_estimate=pl.CostEstimate(
            flops=int(flops1),
            transcendentals=int(2 * Bp * H),
            bytes_accessed=bytes1),
    )(x_p, wq1, bq1, wmu, bmu, wlv, blv, wp1, bp1)

    # ---- kernel 2: decoder layer 2 (output-N streaming, big lane-dense tiles)
    n_ntiles = N2 // t_out
    grid2 = (n_ntiles, Bp // tm)    # weight-tile axis outer, batch inner
    flops2 = 2 * Bp * H * N2
    bytes2 = int(n_ntiles * d_p.size * a_isize               # d re-read per N tile
                 + wp2.size * w_isize + bp2.size * 4
                 + Bp * N2 * jnp.dtype(recon_dtype).itemsize)

    recon_p = pl.pallas_call(
        _decoder_kernel,
        out_shape=jax.ShapeDtypeStruct((Bp, N2), recon_dtype),
        grid_spec=pltpu.PrefetchScalarGridSpec(
            num_scalar_prefetch=0,
            grid=grid2,
            in_specs=[
                pl.BlockSpec((tm, H), lambda j, i: (i, 0)),         # d
                pl.BlockSpec((H, t_out), lambda j, i: (0, j)),      # wp2 (stream N)
                pl.BlockSpec((1, t_out), lambda j, i: (0, j)),      # bp2
            ],
            out_specs=pl.BlockSpec((tm, t_out), lambda j, i: (i, j)),
        ),
        compiler_params=pltpu.CompilerParams(
            dimension_semantics=("parallel", "parallel"),
            vmem_limit_bytes=cfg["vmem_limit"]),
        cost_estimate=pl.CostEstimate(
            flops=int(flops2), transcendentals=0, bytes_accessed=bytes2),
    )(d_p, wp2, bp2)

    return (recon_p[:B, :n_items], mu_p[:B, :latent], logvar_p[:B, :latent])


# --------------------------------------------------------------------------- #
# Params / reference
# --------------------------------------------------------------------------- #
def init_params(key, p_dims):
    """Deterministic init mirroring MultiVAE.init_weights().

    p_dims = [latent, hidden, n_items]; q_dims = reversed(p_dims);
    temp_q_dims = q_dims[:-1] + [2*latent].  Weights stored as [in, out].
    """
    q_dims = p_dims[::-1]
    temp_q_dims = q_dims[:-1] + [q_dims[-1] * 2]

    def make_linear(k, d_in, d_out):
        kw, kb = jax.random.split(k)
        std = np.sqrt(2.0 / (d_out + d_in))
        w = jax.random.normal(kw, (d_in, d_out), jnp.float32) * std
        b = jax.random.normal(kb, (1, d_out), jnp.float32) * 0.001
        return w, b

    keys = jax.random.split(key, 4)
    params = {}
    params["wq1"], params["bq1"] = make_linear(keys[0], temp_q_dims[0], temp_q_dims[1])
    params["wq2"], params["bq2"] = make_linear(keys[1], temp_q_dims[1], temp_q_dims[2])
    params["wp1"], params["bp1"] = make_linear(keys[2], p_dims[0], p_dims[1])
    params["wp2"], params["bp2"] = make_linear(keys[3], p_dims[1], p_dims[2])
    return params


def cast_weights(params, dtype):
    """Cast only the matmul weights (MXU inputs); biases stay f32."""
    out = dict(params)
    for k in ("wq1", "wq2", "wp1", "wp2"):
        out[k] = params[k].astype(dtype)
    return out


def reference_forward(x, params):
    """Pure-JAX f32 reference matching the PyTorch module (eval mode)."""
    norm = jnp.sqrt(jnp.sum(x * x, axis=-1, keepdims=True))
    h = x / jnp.maximum(norm, 1e-12)
    h = jnp.tanh(h @ params["wq1"].astype(jnp.float32) + params["bq1"])
    h2 = h @ params["wq2"].astype(jnp.float32) + params["bq2"]
    latent = params["wp1"].shape[0]
    mu, logvar = h2[:, :latent], h2[:, latent:]
    d = jnp.tanh(mu @ params["wp1"].astype(jnp.float32) + params["bp1"])
    recon = d @ params["wp2"].astype(jnp.float32) + params["bp2"]
    return recon, mu, logvar


# --------------------------------------------------------------------------- #
# Test
# --------------------------------------------------------------------------- #
if __name__ == "__main__":
    key = jax.random.PRNGKey(0)

    # --- test 1: small shapes, f32 weights, default tiles, tight tolerance --
    p_dims = [16, 32, 64]          # [latent, hidden, n_items]
    batch = 8
    kx, kp, key = jax.random.split(key, 3)
    x = jax.random.uniform(kx, (batch, p_dims[-1]), jnp.float32)
    params = init_params(kp, p_dims)

    recon, mu, logvar = multivae_forward(x, params)
    jax.block_until_ready((recon, mu, logvar))
    r_ref, mu_ref, lv_ref = reference_forward(x, params)
    np.testing.assert_allclose(np.asarray(recon), np.asarray(r_ref), rtol=1e-5, atol=1e-5)
    np.testing.assert_allclose(np.asarray(mu), np.asarray(mu_ref), rtol=1e-5, atol=1e-5)
    np.testing.assert_allclose(np.asarray(logvar), np.asarray(lv_ref), rtol=1e-5, atol=1e-5)

    # --- test 2: multi-tile grids (batch / K / N all tiled), f32 ------------
    p_dims2 = [16, 48, 300]
    batch2 = 20
    kx2, kp2, key = jax.random.split(key, 3)
    x2 = jax.random.uniform(kx2, (batch2, p_dims2[-1]), jnp.float32)
    params2 = init_params(kp2, p_dims2)

    recon2, mu2, lv2 = multivae_forward(x2, params2, tm=8, t_k=128, t_out=128)
    jax.block_until_ready((recon2, mu2, lv2))
    r_ref2, mu_ref2, lv_ref2 = reference_forward(x2, params2)
    np.testing.assert_allclose(np.asarray(recon2), np.asarray(r_ref2), rtol=1e-5, atol=1e-5)
    np.testing.assert_allclose(np.asarray(mu2), np.asarray(mu_ref2), rtol=1e-5, atol=1e-5)
    np.testing.assert_allclose(np.asarray(lv2), np.asarray(lv_ref2), rtol=1e-5, atol=1e-5)

    # --- test 3: bf16 weights (bf16 x/d activations too), loose tolerance ---
    params_bf16 = cast_weights(params, jnp.bfloat16)
    recon_b, mu_b, lv_b = multivae_forward(x, params_bf16)
    jax.block_until_ready((recon_b, mu_b, lv_b))
    np.testing.assert_allclose(np.asarray(recon_b), np.asarray(r_ref), rtol=5e-2, atol=5e-2)
    np.testing.assert_allclose(np.asarray(mu_b), np.asarray(mu_ref), rtol=5e-2, atol=5e-2)
    np.testing.assert_allclose(np.asarray(lv_b), np.asarray(lv_ref), rtol=5e-2, atol=5e-2)

    print("KERNEL_OK")
</pallas_src>

<mosaic_0001>
module attributes {stable_mosaic.version = 11 : i64} {
  func.func @_encoder_kernel(%arg0: i32, %arg1: i32, %arg2: memref<8x128xf32, #tpu.memory_space<vmem>>, %arg3: memref<128x128xf32, #tpu.memory_space<vmem>>, %arg4: memref<1x128xf32, #tpu.memory_space<vmem>>, %arg5: memref<128x128xf32, #tpu.memory_space<vmem>>, %arg6: memref<1x128xf32, #tpu.memory_space<vmem>>, %arg7: memref<128x128xf32, #tpu.memory_space<vmem>>, %arg8: memref<1x128xf32, #tpu.memory_space<vmem>>, %arg9: memref<128x128xf32, #tpu.memory_space<vmem>>, %arg10: memref<1x128xf32, #tpu.memory_space<vmem>>, %arg11: memref<8x128xf32, #tpu.memory_space<vmem>>, %arg12: memref<8x128xf32, #tpu.memory_space<vmem>>, %arg13: memref<8x128xf32, #tpu.memory_space<vmem>>, %arg14: memref<8x128xf32, #tpu.memory_space<vmem>>, %arg15: memref<8x128xf32, #tpu.memory_space<vmem>>) attributes {dimension_semantics = [#tpu.dimension_semantics<parallel>, #tpu.dimension_semantics<arbitrary>], iteration_bounds = array<i64: 1, 1>, scalar_prefetch = 0 : i64, scratch_operands = 2 : i64, tpu.core_type = #tpu.core_type<tc>, window_params = [{transform_indices = @transform_0, window_bounds = array<i64: 8, 128>}, {transform_indices = @transform_1, window_bounds = array<i64: 128, 128>}, {pipeline_mode = #tpu.pipeline_mode<synchronous>, transform_indices = @transform_2, window_bounds = array<i64: 1, 128>}, {pipeline_mode = #tpu.pipeline_mode<synchronous>, transform_indices = @transform_3, window_bounds = array<i64: 128, 128>}, {pipeline_mode = #tpu.pipeline_mode<synchronous>, transform_indices = @transform_4, window_bounds = array<i64: 1, 128>}, {pipeline_mode = #tpu.pipeline_mode<synchronous>, transform_indices = @transform_5, window_bounds = array<i64: 128, 128>}, {pipeline_mode = #tpu.pipeline_mode<synchronous>, transform_indices = @transform_6, window_bounds = array<i64: 1, 128>}, {pipeline_mode = #tpu.pipeline_mode<synchronous>, transform_indices = @transform_7, window_bounds = array<i64: 128, 128>}, {pipeline_mode = #tpu.pipeline_mode<synchronous>, transform_indices = @transform_8, window_bounds = array<i64: 1, 128>}, {transform_indices = @transform_9, window_bounds = array<i64: 8, 128>}, {transform_indices = @transform_10, window_bounds = array<i64: 8, 128>}, {transform_indices = @transform_11, window_bounds = array<i64: 8, 128>}]} {
    %c0_i32 = arith.constant 0 : i32
    %0 = arith.cmpi eq, %arg1, %c0_i32 : i32
    %1 = arith.extui %0 : i1 to i32
    %c0_i32_0 = arith.constant 0 : i32
    %2 = arith.cmpi ne, %1, %c0_i32_0 : i32
    scf.if %2 {
      %cst_14 = arith.constant 0.000000e+00 : f32
      %16 = vector.broadcast %cst_14 : f32 to vector<8x128xf32>
      %c0_15 = arith.constant 0 : index
      %c0_16 = arith.constant 0 : index
      %17 = vector.load %arg14[%c0_15, %c0_16] : memref<8x128xf32, #tpu.memory_space<vmem>>, vector<8x128xf32>
      tpu.vector_store %arg14[%c0_15, %c0_16], %16 {strides = array<i32>} : memref<8x128xf32, #tpu.memory_space<vmem>>, vector<8x128xf32>,
      %cst_17 = arith.constant 0.000000e+00 : f32
      %18 = vector.broadcast %cst_17 : f32 to vector<8x128xf32>
      %c0_18 = arith.constant 0 : index
      %c0_19 = arith.constant 0 : index
      %19 = vector.load %arg15[%c0_18, %c0_19] : memref<8x128xf32, #tpu.memory_space<vmem>>, vector<8x128xf32>
      tpu.vector_store %arg15[%c0_18, %c0_19], %18 {strides = array<i32>} : memref<8x128xf32, #tpu.memory_space<vmem>>, vector<8x128xf32>,
    } else {
    }
    %c0 = arith.constant 0 : index
    %c0_1 = arith.constant 0 : index
    %3 = vector.load %arg2[%c0, %c0_1] : memref<8x128xf32, #tpu.memory_space<vmem>>, vector<8x128xf32>
    %4 = arith.mulf %3, %3 : vector<8x128xf32>
    %c0_2 = arith.constant 0 : index
    %c0_3 = arith.constant 0 : index
    %5 = vector.load %arg15[%c0_2, %c0_3] : memref<8x128xf32, #tpu.memory_space<vmem>>, vector<8x128xf32>
    %6 = arith.addf %5, %4 : vector<8x128xf32>
    %c0_4 = arith.constant 0 : index
    %c0_5 = arith.constant 0 : index
    %7 = vector.load %arg15[%c0_4, %c0_5] : memref<8x128xf32, #tpu.memory_space<vmem>>, vector<8x128xf32>
    tpu.vector_store %arg15[%c0_4, %c0_5], %6 {strides = array<i32>} : memref<8x128xf32, #tpu.memory_space<vmem>>, vector<8x128xf32>,
    %c0_6 = arith.constant 0 : index
    %c0_7 = arith.constant 0 : index
    %8 = vector.load %arg14[%c0_6, %c0_7] : memref<8x128xf32, #tpu.memory_space<vmem>>, vector<8x128xf32>
    %c0_8 = arith.constant 0 : index
    %c0_9 = arith.constant 0 : index
    %9 = vector.load %arg3[%c0_8, %c0_9] : memref<128x128xf32, #tpu.memory_space<vmem>>, vector<128x128xf32>
    %cst = arith.constant dense<0.000000e+00> : vector<8x128xf32>
    %10 = tpu.matmul %3, %9, %cst {dimension_numbers = #tpu.dot_dimension_numbers<[1], [0], [0], [1], [0, 0, 1, 1], [], []>} : vector<8x128xf32>, vector<128x128xf32>, vector<8x128xf32> -> vector<8x128xf32>
    %11 = arith.addf %8, %10 : vector<8x128xf32>
    %c0_10 = arith.constant 0 : index
    %c0_11 = arith.constant 0 : index
    %12 = vector.load %arg14[%c0_10, %c0_11] : memref<8x128xf32, #tpu.memory_space<vmem>>, vector<8x128xf32>
    tpu.vector_store %arg14[%c0_10, %c0_11], %11 {strides = array<i32>} : memref<8x128xf32, #tpu.memory_space<vmem>>, vector<8x128xf32>,
    %c0_i32_12 = arith.constant 0 : i32
    %13 = arith.cmpi eq, %arg1, %c0_i32_12 : i32
    %14 = arith.extui %13 : i1 to i32
    %c0_i32_13 = arith.constant 0 : i32
    %15 = arith.cmpi ne, %14, %c0_i32_13 : i32
    scf.if %15 {
      %c0_14 = arith.constant 0 : index
      %c0_15 = arith.constant 0 : index
      %16 = vector.load %arg15[%c0_14, %c0_15] : memref<8x128xf32, #tpu.memory_space<vmem>>, vector<8x128xf32>
      %cst_16 = arith.constant dense<0.000000e+00> : vector<8xf32>
      %17 = vector.multi_reduction <add>, %16, %cst_16 [1] : vector<8x128xf32> to vector<8xf32>
      %18 = vector.shape_cast %17 : vector<8xf32> to vector<8x1xf32>
      %cst_17 = arith.constant 1.000000e-24 : f32
      %19 = vector.broadcast %cst_17 : f32 to vector<8x1xf32>
      %20 = arith.maximumf %18, %19 : vector<8x1xf32>
      %21 = math.rsqrt %20 : vector<8x1xf32>
      %c0_18 = arith.constant 0 : index
      %c0_19 = arith.constant 0 : index
      %22 = vector.load %arg14[%c0_18, %c0_19] : memref<8x128xf32, #tpu.memory_space<vmem>>, vector<8x128xf32>
      %23 = vector.broadcast %21 : vector<8x1xf32> to vector<8x128xf32>
      %24 = arith.mulf %22, %23 : vector<8x128xf32>
      %c0_20 = arith.constant 0 : index
      %c0_21 = arith.constant 0 : index
      %25 = vector.load %arg4[%c0_20, %c0_21] : memref<1x128xf32, #tpu.memory_space<vmem>>, vector<1x128xf32>
      %26 = vector.broadcast %25 : vector<1x128xf32> to vector<8x128xf32>
      %27 = arith.addf %24, %26 : vector<8x128xf32>
      %28 = math.tanh %27 : vector<8x128xf32>
      %c0_22 = arith.constant 0 : index
      %c0_23 = arith.constant 0 : index
      %29 = vector.load %arg5[%c0_22, %c0_23] : memref<128x128xf32, #tpu.memory_space<vmem>>, vector<128x128xf32>
      %cst_24 = arith.constant dense<0.000000e+00> : vector<8x128xf32>
      %30 = tpu.matmul %28, %29, %cst_24 {dimension_numbers = #tpu.dot_dimension_numbers<[1], [0], [0], [1], [0, 0, 1, 1], [], []>} : vector<8x128xf32>, vector<128x128xf32>, vector<8x128xf32> -> vector<8x128xf32>
      %c0_25 = arith.constant 0 : index
      %c0_26 = arith.constant 0 : index
      %31 = vector.load %arg6[%c0_25, %c0_26] : memref<1x128xf32, #tpu.memory_space<vmem>>, vector<1x128xf32>
      %32 = vector.broadcast %31 : vector<1x128xf32> to vector<8x128xf32>
      %33 = arith.addf %30, %32 : vector<8x128xf32>
      %c0_27 = arith.constant 0 : index
      %c0_28 = arith.constant 0 : index
      %34 = vector.load %arg7[%c0_27, %c0_28] : memref<128x128xf32, #tpu.memory_space<vmem>>, vector<128x128xf32>
      %cst_29 = arith.constant dense<0.000000e+00> : vector<8x128xf32>
      %35 = tpu.matmul %28, %34, %cst_29 {dimension_numbers = #tpu.dot_dimension_numbers<[1], [0], [0], [1], [0, 0, 1, 1], [], []>} : vector<8x128xf32>, vector<128x128xf32>, vector<8x128xf32> -> vector<8x128xf32>
      %c0_30 = arith.constant 0 : index
      %c0_31 = arith.constant 0 : index
      %36 = vector.load %arg8[%c0_30, %c0_31] : memref<1x128xf32, #tpu.memory_space<vmem>>, vector<1x128xf32>
      %37 = vector.broadcast %36 : vector<1x128xf32> to vector<8x128xf32>
      %38 = arith.addf %35, %37 : vector<8x128xf32>
      %c0_32 = arith.constant 0 : index
      %c0_33 = arith.constant 0 : index
      %39 = vector.load %arg9[%c0_32, %c0_33] : memref<128x128xf32, #tpu.memory_space<vmem>>, vector<128x128xf32>
      %cst_34 = arith.constant dense<0.000000e+00> : vector<8x128xf32>
      %40 = tpu.matmul %33, %39, %cst_34 {dimension_numbers = #tpu.dot_dimension_numbers<[1], [0], [0], [1], [0, 0, 1, 1], [], []>} : vector<8x128xf32>, vector<128x128xf32>, vector<8x128xf32> -> vector<8x128xf32>
      %c0_35 = arith.constant 0 : index
      %c0_36 = arith.constant 0 : index
      %41 = vector.load %arg10[%c0_35, %c0_36] : memref<1x128xf32, #tpu.memory_space<vmem>>, vector<1x128xf32>
      %42 = vector.broadcast %41 : vector<1x128xf32> to vector<8x128xf32>
      %43 = arith.addf %40, %42 : vector<8x128xf32>
      %44 = math.tanh %43 : vector<8x128xf32>
      %c0_37 = arith.constant 0 : index
      %c0_38 = arith.constant 0 : index
      %45 = vector.load %arg11[%c0_37, %c0_38] : memref<8x128xf32, #tpu.memory_space<vmem>>, vector<8x128xf32>
      tpu.vector_store %arg11[%c0_37, %c0_38], %33 {strides = array<i32>} : memref<8x128xf32, #tpu.memory_space<vmem>>, vector<8x128xf32>,
      %c0_39 = arith.constant 0 : index
      %c0_40 = arith.constant 0 : index
      %46 = vector.load %arg12[%c0_39, %c0_40] : memref<8x128xf32, #tpu.memory_space<vmem>>, vector<8x128xf32>
      tpu.vector_store %arg12[%c0_39, %c0_40], %38 {strides = array<i32>} : memref<8x128xf32, #tpu.memory_space<vmem>>, vector<8x128xf32>,
      %c0_41 = arith.constant 0 : index
      %c0_42 = arith.constant 0 : index
      %47 = vector.load %arg13[%c0_41, %c0_42] : memref<8x128xf32, #tpu.memory_space<vmem>>, vector<8x128xf32>
      tpu.vector_store %arg13[%c0_41, %c0_42], %44 {strides = array<i32>} : memref<8x128xf32, #tpu.memory_space<vmem>>, vector<8x128xf32>,
    } else {
    }
    return
  }
  func.func @transform_0(%arg0: i32, %arg1: i32) -> (i32, i32) {
    %c0_i32 = arith.constant 0 : i32
    return %arg0, %arg1 : i32, i32
  }
  func.func @transform_1(%arg0: i32, %arg1: i32) -> (i32, i32) {
    %c0_i32 = arith.constant 0 : i32
    %c0_i32_0 = arith.constant 0 : i32
    return %arg1, %c0_i32 : i32, i32
  }
  func.func @transform_2(%arg0: i32, %arg1: i32) -> (i32, i32) {
    %c0_i32 = arith.constant 0 : i32
    %c0_i32_0 = arith.constant 0 : i32
    %c0_i32_1 = arith.constant 0 : i32
    return %c0_i32, %c0_i32_0 : i32, i32
  }
  func.func @transform_3(%arg0: i32, %arg1: i32) -> (i32, i32) {
    %c0_i32 = arith.constant 0 : i32
    %c0_i32_0 = arith.constant 0 : i32
    %c0_i32_1 = arith.constant 0 : i32
    return %c0_i32, %c0_i32_0 : i32, i32
  }
  func.func @transform_4(%arg0: i32, %arg1: i32) -> (i32, i32) {
    %c0_i32 = arith.constant 0 : i32
    %c0_i32_0 = arith.constant 0 : i32
    %c0_i32_1 = arith.constant 0 : i32
    return %c0_i32, %c0_i32_0 : i32, i32
  }
  func.func @transform_5(%arg0: i32, %arg1: i32) -> (i32, i32) {
    %c0_i32 = arith.constant 0 : i32
    %c0_i32_0 = arith.constant 0 : i32
    %c0_i32_1 = arith.constant 0 : i32
    return %c0_i32, %c0_i32_0 : i32, i32
  }
  func.func @transform_6(%arg0: i32, %arg1: i32) -> (i32, i32) {
    %c0_i32 = arith.constant 0 : i32
    %c0_i32_0 = arith.constant 0 : i32
    %c0_i32_1 = arith.constant 0 : i32
    return %c0_i32, %c0_i32_0 : i32, i32
  }
  func.func @transform_7(%arg0: i32, %arg1: i32) -> (i32, i32) {
    %c0_i32 = arith.constant 0 : i32
    %c0_i32_0 = arith.constant 0 : i32
    %c0_i32_1 = arith.constant 0 : i32
    return %c0_i32, %c0_i32_0 : i32, i32
  }
  func.func @transform_8(%arg0: i32, %arg1: i32) -> (i32, i32) {
    %c0_i32 = arith.constant 0 : i32
    %c0_i32_0 = arith.constant 0 : i32
    %c0_i32_1 = arith.constant 0 : i32
    return %c0_i32, %c0_i32_0 : i32, i32
  }
  func.func @transform_9(%arg0: i32, %arg1: i32) -> (i32, i32) {
    %c0_i32 = arith.constant 0 : i32
    %c0_i32_0 = arith.constant 0 : i32
    return %arg0, %c0_i32 : i32, i32
  }
  func.func @transform_10(%arg0: i32, %arg1: i32) -> (i32, i32) {
    %c0_i32 = arith.constant 0 : i32
    %c0_i32_0 = arith.constant 0 : i32
    return %arg0, %c0_i32 : i32, i32
  }
  func.func @transform_11(%arg0: i32, %arg1: i32) -> (i32, i32) {
    %c0_i32 = arith.constant 0 : i32
    %c0_i32_0 = arith.constant 0 : i32
    return %arg0, %c0_i32 : i32, i32
  }
}

</mosaic_0001>

<llo_original>
// kernel: tpu_custom_call.1
$region0: #{tpu_custom_call.1}
  #allocation0 [shape = 'u32[]', space=smem, size = 0x4, offset = 0x4, fixed_abs, tag = 'smem constant byte address 0x4 - core index']
  #allocation1 [shape = 'u32[144,128]{1,0:T(1,128)}', space=vmem, size = 0x12000, scoped, tag = 'internal scratch']
  #allocation2 [shape = 'f32[8,128]{1,0:T(8,128)}', space=vmem, size = 0x1000, scoped, tag = 'scratch operand']
  #allocation3 [shape = 'f32[8,128]{1,0:T(8,128)}', space=vmem, size = 0x1000, scoped, tag = 'scratch operand']
  %s0 = inlined_call_operand.hbm [shape: f32[8,128], index: 0, kind: input, shape index: {}]
  %s1 = inlined_call_operand.hbm [shape: f32[128,128], index: 1, kind: input, shape index: {}]
  %s2 = inlined_call_operand.vmem [shape: f32[1,128], index: 2, kind: input, shape index: {}]
  %s3 = inlined_call_operand.hbm [shape: f32[128,128], index: 3, kind: input, shape index: {}]
  %s4 = inlined_call_operand.vmem [shape: f32[1,128], index: 4, kind: input, shape index: {}]
  %s5 = inlined_call_operand.hbm [shape: f32[128,128], index: 5, kind: input, shape index: {}]
  %s6 = inlined_call_operand.vmem [shape: f32[1,128], index: 6, kind: input, shape index: {}]
  %s7 = inlined_call_operand.hbm [shape: f32[128,128], index: 7, kind: input, shape index: {}]
  %s8 = inlined_call_operand.vmem [shape: f32[1,128], index: 8, kind: input, shape index: {}]
  %s9 = inlined_call_operand.hbm [shape: f32[8,128], index: 9, kind: output, shape index: {0}]
  %s10 = inlined_call_operand.hbm [shape: f32[8,128], index: 10, kind: output, shape index: {1}]
  %s11 = inlined_call_operand.hbm [shape: f32[8,128], index: 11, kind: output, shape index: {2}]
  %12 = xla_tuple %s9, %s10, %s11
  %s13 = sld [smem:[#allocation0]]
  $region90: #{tpu_custom_call.1} parent=0
    _
  %s15 = ssub.s32 1, %s13
  %s16 = scalar_select 0, %s15, %s13
  $region1: #{tpu_custom_call.1} parent=0
    #allocation4 [shape = 'u8[4096]{0}', space=vmem, size = 0x1000, scoped, tag = 'input window, operand 0, single buffered']
    #allocation5 [shape = 's32[1]{0}', space=sflag, size = 0x4, scoped, tag = 'scoped memory for tpu_custom_call.1']
    #allocation6 [shape = 's32[1]{0}', space=sflag, size = 0x4, scoped, tag = 'scoped memory for tpu_custom_call.1']
    #allocation7 [shape = 'u8[65536]{0}', space=vmem, size = 0x10000, scoped, tag = 'input window, operand 1, single buffered']
    #allocation8 [shape = 's32[1]{0}', space=sflag, size = 0x4, scoped, tag = 'scoped memory for tpu_custom_call.1']
    #allocation9 [shape = 'u8[65536]{0}', space=vmem, size = 0x10000, scoped, tag = 'input window, operand 3, single buffered']
    #allocation10 [shape = 'u8[65536]{0}', space=vmem, size = 0x10000, scoped, tag = 'input window, operand 5, single buffered']
    #allocation11 [shape = 's32[1]{0}', space=sflag, size = 0x4, scoped, tag = 'scoped memory for tpu_custom_call.1']
    #allocation12 [shape = 'u8[65536]{0}', space=vmem, size = 0x10000, scoped, tag = 'input window, operand 7, single buffered']
    #allocation13 [shape = 'u8[4096]{0}', space=vmem, size = 0x1000, scoped, tag = 'output window, operand 0, single buffered']
    #allocation14 [shape = 'u8[4096]{0}', space=vmem, size = 0x1000, scoped, tag = 'output window, operand 1, single buffered']
    #allocation15 [shape = 's32[1]{0}', space=sflag, size = 0x4, scoped, tag = 'scoped memory for tpu_custom_call.1']
    #allocation16 [shape = 'u8[4096]{0}', space=vmem, size = 0x1000, scoped, tag = 'output window, operand 2, single buffered']
    %17 = vsyncpa [#allocation5], 0
    %18 = vsyncpa [#allocation8], 0
    %19 = vsyncpa [#allocation11], 0
    %20 = vsyncpa [#allocation6], 0
    %21 = vsyncpa [#allocation15], 0
    // Predicated region
    $region2: #{tpu_custom_call.1} parent=1 // pred_check
      _
    $region3: #{tpu_custom_call.1} parent=1 // pred_check_branch
      %23 = sbr.rel (0) target = $region5
    $region4: #{tpu_custom_call.1} parent=1 // pred_region
      %s25 = ssub.s32 128, 128
      %26 = vsyncadd [#allocation5], %s25
      %s28 = sshll.u32 [#allocation4], 4
      %s29 = int_to_ptr.vmem [resolvable:$true] %s28
      %31 = dma.hbm_to_vmem [thread:$0]  %s0, 128, %s29, [#allocation5]
    $region5: #{tpu_custom_call.1} parent=1 // pred_fallthru
      _
    // Predicated region
    $region6: #{tpu_custom_call.1} parent=1 // pred_check
      _
    $region7: #{tpu_custom_call.1} parent=1 // pred_check_branch
      %33 = sbr.rel (0) target = $region9
    $region8: #{tpu_custom_call.1} parent=1 // pred_region
      %s35 = ssub.s32 2048, 2048
      %36 = vsyncadd [#allocation8], %s35
      %s37 = sshll.u32 [#allocation7], 4
      %s38 = int_to_ptr.vmem [resolvable:$true] %s37
      %43 = dma.hbm_to_vmem [thread:$0]  %s1, 2048, %s38, [#allocation8], 128, 128, 8
    $region9: #{tpu_custom_call.1} parent=1 // pred_fallthru
      _
    // Predicated region
    $region10: #{tpu_custom_call.1} parent=1 // pred_check
      _
    $region11: #{tpu_custom_call.1} parent=1 // pred_check_branch
      %45 = sbr.rel (0) target = $region13
    $region12: #{tpu_custom_call.1} parent=1 // pred_region
      _
    $region13: #{tpu_custom_call.1} parent=1 // pred_fallthru
      _
    // Predicated region
    $region14: #{tpu_custom_call.1} parent=1 // pred_check
      _
    $region15: #{tpu_custom_call.1} parent=1 // pred_check_branch
      %47 = sbr.rel (0) target = $region17
    $region16: #{tpu_custom_call.1} parent=1 // pred_region
      %s49 = ssub.s32 2048, 2048
      %50 = vsyncadd [#allocation8], %s49
      %s51 = sshll.u32 [#allocation9], 4
      %s52 = int_to_ptr.vmem [resolvable:$true] %s51
      %57 = dma.hbm_to_vmem [thread:$0]  %s3, 2048, %s52, [#allocation8], 128, 128, 8
    $region17: #{tpu_custom_call.1} parent=1 // pred_fallthru
      _
    // Predicated region
    $region18: #{tpu_custom_call.1} parent=1 // pred_check
      _
    $region19: #{tpu_custom_call.1} parent=1 // pred_check_branch
      %59 = sbr.rel (0) target = $region21
    $region20: #{tpu_custom_call.1} parent=1 // pred_region
      _
    $region21: #{tpu_custom_call.1} parent=1 // pred_fallthru
      _
    // Predicated region
    $region22: #{tpu_custom_call.1} parent=1 // pred_check
      _
    $region23: #{tpu_custom_call.1} parent=1 // pred_check_branch
      %61 = sbr.rel (0) target = $region25
    $region24: #{tpu_custom_call.1} parent=1 // pred_region
      %s63 = ssub.s32 2048, 2048
      %64 = vsyncadd [#allocation11], %s63
      %s65 = sshll.u32 [#allocation10], 4
      %s66 = int_to_ptr.vmem [resolvable:$true] %s65
      %71 = dma.hbm_to_vmem [thread:$0]  %s5, 2048, %s66, [#allocation11], 128, 128, 8
    $region25: #{tpu_custom_call.1} parent=1 // pred_fallthru
      _
    // Predicated region
    $region26: #{tpu_custom_call.1} parent=1 // pred_check
      _
    $region27: #{tpu_custom_call.1} parent=1 // pred_check_branch
      %73 = sbr.rel (0) target = $region29
    $region28: #{tpu_custom_call.1} parent=1 // pred_region
      _
    $region29: #{tpu_custom_call.1} parent=1 // pred_fallthru
      _
    // Predicated region
    $region30: #{tpu_custom_call.1} parent=1 // pred_check
      _
    $region31: #{tpu_custom_call.1} parent=1 // pred_check_branch
      %75 = sbr.rel (0) target = $region33
    $region32: #{tpu_custom_call.1} parent=1 // pred_region
      %s77 = ssub.s32 2048, 2048
      %78 = vsyncadd [#allocation11], %s77
      %s79 = sshll.u32 [#allocation12], 4
      %s80 = int_to_ptr.vmem [resolvable:$true] %s79
      %85 = dma.hbm_to_vmem [thread:$0]  %s7, 2048, %s80, [#allocation11], 128, 128, 8
    $region33: #{tpu_custom_call.1} parent=1 // pred_fallthru
      _
    // Predicated region
    $region34: #{tpu_custom_call.1} parent=1 // pred_check
      _
    $region35: #{tpu_custom_call.1} parent=1 // pred_check_branch
      %87 = sbr.rel (0) target = $region37
    $region36: #{tpu_custom_call.1} parent=1 // pred_region
      _
    $region37: #{tpu_custom_call.1} parent=1 // pred_fallthru
      _
    // Predicated region
    $region38: #{tpu_custom_call.1} parent=1 // pred_check
      _
    $region39: #{tpu_custom_call.1} parent=1 // pred_check_branch
      %89 = sbr.rel (0) target = $region41
    $region40: #{tpu_custom_call.1} parent=1 // pred_region
      %90 = dma.done [#allocation5], 128
    $region41: #{tpu_custom_call.1} parent=1 // pred_fallthru
      _
    // Predicated region
    $region42: #{tpu_custom_call.1} parent=1 // pred_check
      _
    $region43: #{tpu_custom_call.1} parent=1 // pred_check_branch
      %92 = sbr.rel (0) target = $region45
    $region44: #{tpu_custom_call.1} parent=1 // pred_region
      %93 = dma.done [#allocation8], 2048
    $region45: #{tpu_custom_call.1} parent=1 // pred_fallthru
      _
    // Predicated region
    $region46: #{tpu_custom_call.1} parent=1 // pred_check
      _
    $region47: #{tpu_custom_call.1} parent=1 // pred_check_branch
      %95 = sbr.rel (0) target = $region49
    $region48: #{tpu_custom_call.1} parent=1 // pred_region
      %96 = dma.done [#allocation8], 2048
    $region49: #{tpu_custom_call.1} parent=1 // pred_fallthru
      _
    // Predicated region
    $region50: #{tpu_custom_call.1} parent=1 // pred_check
      _
    $region51: #{tpu_custom_call.1} parent=1 // pred_check_branch
      %98 = sbr.rel (0) target = $region53
    $region52: #{tpu_custom_call.1} parent=1 // pred_region
      %99 = dma.done [#allocation11], 2048
    $region53: #{tpu_custom_call.1} parent=1 // pred_fallthru
      _
    // Predicated region
    $region54: #{tpu_custom_call.1} parent=1 // pred_check
      _
    $region55: #{tpu_custom_call.1} parent=1 // pred_check_branch
      %101 = sbr.rel (0) target = $region57
    $region56: #{tpu_custom_call.1} parent=1 // pred_region
      %102 = dma.done [#allocation11], 2048
    $region57: #{tpu_custom_call.1} parent=1 // pred_fallthru
      _
    %p103 = scmp.eq.s32.totalorder 0, 0
    // Predicated region
    $region58: #{tpu_custom_call.1} parent=1 // pred_check
      %p104 = pneg %p103
    $region59: #{tpu_custom_call.1} parent=1 // pred_check_branch
      %106 = sbr.rel (%p104) target = $region61
    $region60: #{tpu_custom_call.1} parent=1 // pred_region
      %107 = vst [vmem:[#allocation2] sm:$0xff] 0.0
      %108 = vst [vmem:[#allocation3] sm:$0xff] 0.0
    $region61: #{tpu_custom_call.1} parent=1 // pred_fallthru
      _
    %v109 = vld [vmem:[#allocation4] sm:$0xff]
    %v110 = vmul.f32 %v109, %v109
    %v111 = vld [vmem:[#allocation3] sm:$0xff]
    %v112 = vadd.f32 %v111, %v110
    %113 = vst [vmem:[#allocation3] sm:$0xff] %v112
    %v114 = vld [vmem:[#allocation2] sm:$0xff]
    %v115 = vld [vmem:[#allocation7] sm:$0xff]
    %v116 = vld [vmem:[#allocation7 + $0x8] sm:$0xff]
    %v117 = vld [vmem:[#allocation7 + $0x10] sm:$0xff]
    %v118 = vld [vmem:[#allocation7 + $0x18] sm:$0xff]
    %v119 = vld [vmem:[#allocation7 + $0x20] sm:$0xff]
    %v120 = vld [vmem:[#allocation7 + $0x28] sm:$0xff]
    %v121 = vld [vmem:[#allocation7 + $0x30] sm:$0xff]
    %v122 = vld [vmem:[#allocation7 + $0x38] sm:$0xff]
    %v123 = vld [vmem:[#allocation7 + $0x40] sm:$0xff]
    %v124 = vld [vmem:[#allocation7 + $0x48] sm:$0xff]
    %v125 = vld [vmem:[#allocation7 + $0x50] sm:$0xff]
    %v126 = vld [vmem:[#allocation7 + $0x58] sm:$0xff]
    %v127 = vld [vmem:[#allocation7 + $0x60] sm:$0xff]
    %v128 = vld [vmem:[#allocation7 + $0x68] sm:$0xff]
    %v129 = vld [vmem:[#allocation7 + $0x70] sm:$0xff]
    %v130 = vld [vmem:[#allocation7 + $0x78] sm:$0xff]
    %131 = vmatprep.subr.mxu0 0.0
    %132 = vmatpush1.msra.mxu0 %v115
    %133 = vmatprep.subr.mxu0 0.0
    %134 = vmatpush1.msra.mxu0 %v116
    %135 = vmatprep.subr.mxu0 0.0
    %136 = vmatpush1.msra.mxu0 %v117
    %137 = vmatprep.subr.mxu0 0.0
    %138 = vmatpush1.msra.mxu0 %v118
    %139 = vmatprep.subr.mxu0 0.0
    %140 = vmatpush1.msra.mxu0 %v119
    %141 = vmatprep.subr.mxu0 0.0
    %142 = vmatpush1.msra.mxu0 %v120
    %143 = vmatprep.subr.mxu0 0.0
    %144 = vmatpush1.msra.mxu0 %v121
    %145 = vmatprep.subr.mxu0 0.0
    %146 = vmatpush1.msra.mxu0 %v122
    %147 = vmatprep.subr.mxu0 0.0
    %148 = vmatpush1.msra.mxu0 %v123
    %149 = vmatprep.subr.mxu0 0.0
    %150 = vmatpush1.msra.mxu0 %v124
    %151 = vmatprep.subr.mxu0 0.0
    %152 = vmatpush1.msra.mxu0 %v125
    %153 = vmatprep.subr.mxu0 0.0
    %154 = vmatpush1.msra.mxu0 %v126
    %155 = vmatprep.subr.mxu0 0.0
    %156 = vmatpush1.msra.mxu0 %v127
    %157 = vmatprep.subr.mxu0 0.0
    %158 = vmatpush1.msra.mxu0 %v128
    %159 = vmatprep.subr.mxu0 0.0
    %160 = vmatpush1.msra.mxu0 %v129
    %161 = vmatprep.subr.mxu0 0.0
    %162 = vmatpush1.msra.mxu0 %v130
    %163 = vmatprep.subr.mxu0 0.0
    %164 = vmatpush1.msra.mxu0 0.0
    %165 = vmatprep.subr.mxu0 0.0
    %166 = vmatpush1.msra.mxu0 0.0
    %167 = vmatprep.subr.mxu0 0.0
    %168 = vmatpush1.msra.mxu0 0.0
    %169 = vmatprep.subr.mxu0 0.0
    %170 = vmatpush1.msra.mxu0 0.0
    %171 = vmatprep.subr.mxu0 0.0
    %172 = vmatpush1.msra.mxu0 0.0
    %173 = vmatprep.subr.mxu0 0.0
    %174 = vmatpush1.msra.mxu0 0.0
    %175 = vmatprep.subr.mxu0 0.0
    %176 = vmatpush1.msra.mxu0 0.0
    %177 = vmatprep.subr.mxu0 0.0
    %178 = vmatpush1.msra.mxu0 0.0
    %179 = vmatprep.subr.mxu0 0.0
    %180 = vmatpush1.msra.mxu0 0.0
    %181 = vmatprep.subr.mxu0 0.0
    %182 = vmatpush1.msra.mxu0 0.0
    %183 = vmatprep.subr.mxu0 0.0
    %184 = vmatpush1.msra.mxu0 0.0
    %185 = vmatprep.subr.mxu0 0.0
    %186 = vmatpush1.msra.mxu0 0.0
    %187 = vmatprep.subr.mxu0 0.0
    %188 = vmatpush1.msra.mxu0 0.0
    %189 = vmatprep.subr.mxu0 0.0
    %190 = vmatpush1.msra.mxu0 0.0
    %191 = vmatprep.subr.mxu0 0.0
    %192 = vmatpush1.msra.mxu0 0.0
    %193 = vmatprep.subr.mxu0 0.0
    %194 = vmatpush1.msra.mxu0 0.0
    %195 = vmatprep.mubr.f32.mxu0 0.0
    %196 = vmatmul.mubr.f32.gmra.mrb[0].mxu0 %v109
    %v197 = vpop.f32.mrb[0].mxu0
    %v198 = vadd.f32 0.0, %v197
    %v199 = vpop.f32.mrb[0].mxu0
    %200 = vdwg.mxu0
    %v201 = vadd.f32 %v114, %v198
    %202 = vst [vmem:[#allocation2] sm:$0xff] %v201
    // Predicated region
    $region62: #{tpu_custom_call.1} parent=1 // pred_check
      %p203 = pneg %p103
    $region63: #{tpu_custom_call.1} parent=1 // pred_check_branch
      %205 = sbr.rel (%p203) target = $region65
    $region64: #{tpu_custom_call.1} parent=1 // pred_region
      %v206 = vld [vmem:[#allocation3] sm:$0xff]
      %207 = vadd.xlane.f32.xlu0 %v206
      %v208 = vpop.xlane.xlu0 %207
      %v209 = vmax.f32 %v208, 1e-24
      %v210 = vrsqrt.pop %v209
      %v211 = vld [vmem:[#allocation2] sm:$0xff]
      %v212 = vmul.f32 %v211, %v210
      %v213 = vld [vmem:[%s2] sm:$0x1]
      %v215 = vlaneseq
      %v216 = vshrl.u32 %v215, 7
      %v217 = vsub.s32 0, %v216
      %v218 = vrot.slane %v213, %v217
      %v220 = vadd.f32 %v212, %v218
      %v221 = vtanh.pop %v220
      %v222 = vld [vmem:[#allocation9] sm:$0xff]
      %v223 = vld [vmem:[#allocation9 + $0x8] sm:$0xff]
      %v224 = vld [vmem:[#allocation9 + $0x10] sm:$0xff]
      %v225 = vld [vmem:[#allocation9 + $0x18] sm:$0xff]
      %v226 = vld [vmem:[#allocation9 + $0x20] sm:$0xff]
      %v227 = vld [vmem:[#allocation9 + $0x28] sm:$0xff]
      %v228 = vld [vmem:[#allocation9 + $0x30] sm:$0xff]
      %v229 = vld [vmem:[#allocation9 + $0x38] sm:$0xff]
      %v230 = vld [vmem:[#allocation9 + $0x40] sm:$0xff]
      %v231 = vld [vmem:[#allocation9 + $0x48] sm:$0xff]
      %v232 = vld [vmem:[#allocation9 + $0x50] sm:$0xff]
      %v233 = vld [vmem:[#allocation9 + $0x58] sm:$0xff]
      %v234 = vld [vmem:[#allocation9 + $0x60] sm:$0xff]
      %v235 = vld [vmem:[#allocation9 + $0x68] sm:$0xff]
      %v236 = vld [vmem:[#allocation9 + $0x70] sm:$0xff]
      %v237 = vld [vmem:[#allocation9 + $0x78] sm:$0xff]
      %v238 = vld [vmem:[%s4] sm:$0x1]
      %v240 = vlaneseq
      %v241 = vshrl.u32 %v240, 7
      %v242 = vsub.s32 0, %v241
      %v243 = vrot.slane %v238, %v242
      %245 = vmatprep.subr.mxu0 0.0
      %246 = vmatpush1.msra.mxu0 %v222
      %247 = vmatprep.subr.mxu0 0.0
      %248 = vmatpush1.msra.mxu0 %v223
      %249 = vmatprep.subr.mxu0 0.0
      %250 = vmatpush1.msra.mxu0 %v224
      %251 = vmatprep.subr.mxu0 0.0
      %252 = vmatpush1.msra.mxu0 %v225
      %253 = vmatprep.subr.mxu0 0.0
      %254 = vmatpush1.msra.mxu0 %v226
      %255 = vmatprep.subr.mxu0 0.0
      %256 = vmatpush1.msra.mxu0 %v227
      %257 = vmatprep.subr.mxu0 0.0
      %258 = vmatpush1.msra.mxu0 %v228
      %259 = vmatprep.subr.mxu0 0.0
      %260 = vmatpush1.msra.mxu0 %v229
      %261 = vmatprep.subr.mxu0 0.0
      %262 = vmatpush1.msra.mxu0 %v230
      %263 = vmatprep.subr.mxu0 0.0
      %264 = vmatpush1.msra.mxu0 %v231
      %265 = vmatprep.subr.mxu0 0.0
      %266 = vmatpush1.msra.mxu0 %v232
      %267 = vmatprep.subr.mxu0 0.0
      %268 = vmatpush1.msra.mxu0 %v233
      %269 = vmatprep.subr.mxu0 0.0
      %270 = vmatpush1.msra.mxu0 %v234
      %271 = vmatprep.subr.mxu0 0.0
      %272 = vmatpush1.msra.mxu0 %v235
      %273 = vmatprep.subr.mxu0 0.0
      %274 = vmatpush1.msra.mxu0 %v236
      %275 = vmatprep.subr.mxu0 0.0
      %276 = vmatpush1.msra.mxu0 %v237
      %277 = vmatprep.subr.mxu0 0.0
      %278 = vmatpush1.msra.mxu0 0.0
      %279 = vmatprep.subr.mxu0 0.0
      %280 = vmatpush1.msra.mxu0 0.0
      %281 = vmatprep.subr.mxu0 0.0
      %282 = vmatpush1.msra.mxu0 0.0
      %283 = vmatprep.subr.mxu0 0.0
      %284 = vmatpush1.msra.mxu0 0.0
      %285 = vmatprep.subr.mxu0 0.0
      %286 = vmatpush1.msra.mxu0 0.0
      %287 = vmatprep.subr.mxu0 0.0
      %288 = vmatpush1.msra.mxu0 0.0
      %289 = vmatprep.subr.mxu0 0.0
      %290 = vmatpush1.msra.mxu0 0.0
      %291 = vmatprep.subr.mxu0 0.0
      %292 = vmatpush1.msra.mxu0 0.0
      %293 = vmatprep.subr.mxu0 0.0
      %294 = vmatpush1.msra.mxu0 0.0
      %295 = vmatprep.subr.mxu0 0.0
      %296 = vmatpush1.msra.mxu0 0.0
      %297 = vmatprep.subr.mxu0 0.0
      %298 = vmatpush1.msra.mxu0 0.0
      %299 = vmatprep.subr.mxu0 0.0
      %300 = vmatpush1.msra.mxu0 0.0
      %301 = vmatprep.subr.mxu0 0.0
      %302 = vmatpush1.msra.mxu0 0.0
      %303 = vmatprep.subr.mxu0 0.0
      %304 = vmatpush1.msra.mxu0 0.0
      %305 = vmatprep.subr.mxu0 0.0
      %306 = vmatpush1.msra.mxu0 0.0
      %307 = vmatprep.subr.mxu0 0.0
      %308 = vmatpush1.msra.mxu0 0.0
      %309 = vmatprep.mubr.f32.mxu0 0.0
      %310 = vmatmul.mubr.f32.gmra.mrb[0].mxu0 %v221
      %v311 = vpop.f32.mrb[0].mxu0
      %v312 = vadd.f32 %v243, %v311
      %v313 = vpop.f32.mrb[0].mxu0
      %314 = vdwg.mxu0
      %v315 = vld [vmem:[#allocation10] sm:$0xff]
      %v316 = vld [vmem:[#allocation10 + $0x8] sm:$0xff]
      %v317 = vld [vmem:[#allocation10 + $0x10] sm:$0xff]
      %v318 = vld [vmem:[#allocation10 + $0x18] sm:$0xff]
      %v319 = vld [vmem:[#allocation10 + $0x20] sm:$0xff]
      %v320 = vld [vmem:[#allocation10 + $0x28] sm:$0xff]
      %v321 = vld [vmem:[#allocation10 + $0x30] sm:$0xff]
      %v322 = vld [vmem:[#allocation10 + $0x38] sm:$0xff]
      %v323 = vld [vmem:[#allocation10 + $0x40] sm:$0xff]
      %v324 = vld [vmem:[#allocation10 + $0x48] sm:$0xff]
      %v325 = vld [vmem:[#allocation10 + $0x50] sm:$0xff]
      %v326 = vld [vmem:[#allocation10 + $0x58] sm:$0xff]
      %v327 = vld [vmem:[#allocation10 + $0x60] sm:$0xff]
      %v328 = vld [vmem:[#allocation10 + $0x68] sm:$0xff]
      %v329 = vld [vmem:[#allocation10 + $0x70] sm:$0xff]
      %v330 = vld [vmem:[#allocation10 + $0x78] sm:$0xff]
      %v331 = vld [vmem:[%s6] sm:$0x1]
      %v333 = vlaneseq
      %v334 = vshrl.u32 %v333, 7
      %v335 = vsub.s32 0, %v334
      %v336 = vrot.slane %v331, %v335
      %338 = vmatprep.subr.mxu0 0.0
      %339 = vmatpush1.msra.mxu0 %v315
      %340 = vmatprep.subr.mxu0 0.0
      %341 = vmatpush1.msra.mxu0 %v316
      %342 = vmatprep.subr.mxu0 0.0
      %343 = vmatpush1.msra.mxu0 %v317
      %344 = vmatprep.subr.mxu0 0.0
      %345 = vmatpush1.msra.mxu0 %v318
      %346 = vmatprep.subr.mxu0 0.0
      %347 = vmatpush1.msra.mxu0 %v319
      %348 = vmatprep.subr.mxu0 0.0
      %349 = vmatpush1.msra.mxu0 %v320
      %350 = vmatprep.subr.mxu0 0.0
      %351 = vmatpush1.msra.mxu0 %v321
      %352 = vmatprep.subr.mxu0 0.0
      %353 = vmatpush1.msra.mxu0 %v322
      %354 = vmatprep.subr.mxu0 0.0
      %355 = vmatpush1.msra.mxu0 %v323
      %356 = vmatprep.subr.mxu0 0.0
      %357 = vmatpush1.msra.mxu0 %v324
      %358 = vmatprep.subr.mxu0 0.0
      %359 = vmatpush1.msra.mxu0 %v325
      %360 = vmatprep.subr.mxu0 0.0
      %361 = vmatpush1.msra.mxu0 %v326
      %362 = vmatprep.subr.mxu0 0.0
      %363 = vmatpush1.msra.mxu0 %v327
      %364 = vmatprep.subr.mxu0 0.0
      %365 = vmatpush1.msra.mxu0 %v328
      %366 = vmatprep.subr.mxu0 0.0
      %367 = vmatpush1.msra.mxu0 %v329
      %368 = vmatprep.subr.mxu0 0.0
      %369 = vmatpush1.msra.mxu0 %v330
      %370 = vmatprep.subr.mxu0 0.0
      %371 = vmatpush1.msra.mxu0 0.0
      %372 = vmatprep.subr.mxu0 0.0
      %373 = vmatpush1.msra.mxu0 0.0
      %374 = vmatprep.subr.mxu0 0.0
      %375 = vmatpush1.msra.mxu0 0.0
      %376 = vmatprep.subr.mxu0 0.0
      %377 = vmatpush1.msra.mxu0 0.0
      %378 = vmatprep.subr.mxu0 0.0
      %379 = vmatpush1.msra.mxu0 0.0
      %380 = vmatprep.subr.mxu0 0.0
      %381 = vmatpush1.msra.mxu0 0.0
      %382 = vmatprep.subr.mxu0 0.0
      %383 = vmatpush1.msra.mxu0 0.0
      %384 = vmatprep.subr.mxu0 0.0
      %385 = vmatpush1.msra.mxu0 0.0
      %386 = vmatprep.subr.mxu0 0.0
      %387 = vmatpush1.msra.mxu0 0.0
      %388 = vmatprep.subr.mxu0 0.0
      %389 = vmatpush1.msra.mxu0 0.0
      %390 = vmatprep.subr.mxu0 0.0
      %391 = vmatpush1.msra.mxu0 0.0
      %392 = vmatprep.subr.mxu0 0.0
      %393 = vmatpush1.msra.mxu0 0.0
      %394 = vmatprep.subr.mxu0 0.0
      %395 = vmatpush1.msra.mxu0 0.0
      %396 = vmatprep.subr.mxu0 0.0
      %397 = vmatpush1.msra.mxu0 0.0
      %398 = vmatprep.subr.mxu0 0.0
      %399 = vmatpush1.msra.mxu0 0.0
      %400 = vmatprep.subr.mxu0 0.0
      %401 = vmatpush1.msra.mxu0 0.0
      %402 = vmatprep.mubr.f32.mxu0 0.0
      %403 = vmatmul.mubr.f32.gmra.mrb[0].mxu0 %v221
      %v404 = vpop.f32.mrb[0].mxu0
      %v405 = vadd.f32 %v336, %v404
      %v406 = vpop.f32.mrb[0].mxu0
      %407 = vdwg.mxu0
      %v408 = vld [vmem:[#allocation12] sm:$0xff]
      %v409 = vld [vmem:[#allocation12 + $0x8] sm:$0xff]
      %v410 = vld [vmem:[#allocation12 + $0x10] sm:$0xff]
      %v411 = vld [vmem:[#allocation12 + $0x18] sm:$0xff]
      %v412 = vld [vmem:[#allocation12 + $0x20] sm:$0xff]
      %v413 = vld [vmem:[#allocation12 + $0x28] sm:$0xff]
      %v414 = vld [vmem:[#allocation12 + $0x30] sm:$0xff]
      %v415 = vld [vmem:[#allocation12 + $0x38] sm:$0xff]
      %v416 = vld [vmem:[#allocation12 + $0x40] sm:$0xff]
      %v417 = vld [vmem:[#allocation12 + $0x48] sm:$0xff]
      %v418 = vld [vmem:[#allocation12 + $0x50] sm:$0xff]
      %v419 = vld [vmem:[#allocation12 + $0x58] sm:$0xff]
      %v420 = vld [vmem:[#allocation12 + $0x60] sm:$0xff]
      %v421 = vld [vmem:[#allocation12 + $0x68] sm:$0xff]
      %v422 = vld [vmem:[#allocation12 + $0x70] sm:$0xff]
      %v423 = vld [vmem:[#allocation12 + $0x78] sm:$0xff]
      %v424 = vld [vmem:[%s8] sm:$0x1]
      %v426 = vlaneseq
      %v427 = vshrl.u32 %v426, 7
      %v428 = vsub.s32 0, %v427
      %v429 = vrot.slane %v424, %v428
      %431 = vmatprep.subr.mxu0 0.0
      %432 = vmatpush1.msra.mxu0 %v408
      %433 = vmatprep.subr.mxu0 0.0
      %434 = vmatpush1.msra.mxu0 %v409
      %435 = vmatprep.subr.mxu0 0.0
      %436 = vmatpush1.msra.mxu0 %v410
      %437 = vmatprep.subr.mxu0 0.0
      %438 = vmatpush1.msra.mxu0 %v411
      %439 = vmatprep.subr.mxu0 0.0
      %440 = vmatpush1.msra.mxu0 %v412
      %441 = vmatprep.subr.mxu0 0.0
      %442 = vmatpush1.msra.mxu0 %v413
      %443 = vmatprep.subr.mxu0 0.0
      %444 = vmatpush1.msra.mxu0 %v414
      %445 = vmatprep.subr.mxu0 0.0
      %446 = vmatpush1.msra.mxu0 %v415
      %447 = vmatprep.subr.mxu0 0.0
      %448 = vmatpush1.msra.mxu0 %v416
      %449 = vmatprep.subr.mxu0 0.0
      %450 = vmatpush1.msra.mxu0 %v417
      %451 = vmatprep.subr.mxu0 0.0
      %452 = vmatpush1.msra.mxu0 %v418
      %453 = vmatprep.subr.mxu0 0.0
      %454 = vmatpush1.msra.mxu0 %v419
      %455 = vmatprep.subr.mxu0 0.0
      %456 = vmatpush1.msra.mxu0 %v420
      %457 = vmatprep.subr.mxu0 0.0
      %458 = vmatpush1.msra.mxu0 %v421
      %459 = vmatprep.subr.mxu0 0.0
      %460 = vmatpush1.msra.mxu0 %v422
      %461 = vmatprep.subr.mxu0 0.0
      %462 = vmatpush1.msra.mxu0 %v423
      %463 = vmatprep.subr.mxu0 0.0
      %464 = vmatpush1.msra.mxu0 0.0
      %465 = vmatprep.subr.mxu0 0.0
      %466 = vmatpush1.msra.mxu0 0.0
      %467 = vmatprep.subr.mxu0 0.0
      %468 = vmatpush1.msra.mxu0 0.0
      %469 = vmatprep.subr.mxu0 0.0
      %470 = vmatpush1.msra.mxu0 0.0
      %471 = vmatprep.subr.mxu0 0.0
      %472 = vmatpush1.msra.mxu0 0.0
      %473 = vmatprep.subr.mxu0 0.0
      %474 = vmatpush1.msra.mxu0 0.0
      %475 = vmatprep.subr.mxu0 0.0
      %476 = vmatpush1.msra.mxu0 0.0
      %477 = vmatprep.subr.mxu0 0.0
      %478 = vmatpush1.msra.mxu0 0.0
      %479 = vmatprep.subr.mxu0 0.0
      %480 = vmatpush1.msra.mxu0 0.0
      %481 = vmatprep.subr.mxu0 0.0
      %482 = vmatpush1.msra.mxu0 0.0
      %483 = vmatprep.subr.mxu0 0.0
      %484 = vmatpush1.msra.mxu0 0.0
      %485 = vmatprep.subr.mxu0 0.0
      %486 = vmatpush1.msra.mxu0 0.0
      %487 = vmatprep.subr.mxu0 0.0
      %488 = vmatpush1.msra.mxu0 0.0
      %489 = vmatprep.subr.mxu0 0.0
      %490 = vmatpush1.msra.mxu0 0.0
      %491 = vmatprep.subr.mxu0 0.0
      %492 = vmatpush1.msra.mxu0 0.0
      %493 = vmatprep.subr.mxu0 0.0
      %494 = vmatpush1.msra.mxu0 0.0
      %495 = vmatprep.mubr.f32.mxu0 0.0
      %496 = vmatmul.mubr.f32.gmra.mrb[0].mxu0 %v312
      %v497 = vpop.f32.mrb[0].mxu0
      %v498 = vadd.f32 %v429, %v497
      %v499 = vpop.f32.mrb[0].mxu0
      %500 = vdwg.mxu0
      %v501 = vtanh.pop %v498
      %502 = vst [vmem:[#allocation13] sm:$0xff] %v312
      %503 = vst [vmem:[#allocation14] sm:$0xff] %v405
      %504 = vst [vmem:[#allocation16] sm:$0xff] %v501
    $region65: #{tpu_custom_call.1} parent=1 // pred_fallthru
      _
    // Predicated region
    $region66: #{tpu_custom_call.1} parent=1 // pred_check
      _
    $region67: #{tpu_custom_call.1} parent=1 // pred_check_branch
      %506 = sbr.rel (0) target = $region69
    $region68: #{tpu_custom_call.1} parent=1 // pred_region
      %s508 = ssub.s32 128, 128
      %509 = vsyncadd [#allocation6], %s508
      %s511 = sshll.u32 [#allocation13], 4
      %s512 = int_to_ptr.vmem [resolvable:$true] %s511
      %514 = dma.vmem_to_hbm [thread:$0]  %s512, 128, %s9, [#allocation6]
    $region69: #{tpu_custom_call.1} parent=1 // pred_fallthru
      _
    // Predicated region
    $region70: #{tpu_custom_call.1} parent=1 // pred_check
      _
    $region71: #{tpu_custom_call.1} parent=1 // pred_check_branch
      %516 = sbr.rel (0) target = $region73
    $region72: #{tpu_custom_call.1} parent=1 // pred_region
      %s518 = ssub.s32 128, 128
      %519 = vsyncadd [#allocation15], %s518
      %s521 = sshll.u32 [#allocation14], 4
      %s522 = int_to_ptr.vmem [resolvable:$true] %s521
      %524 = dma.vmem_to_hbm [thread:$0]  %s522, 128, %s10, [#allocation15]
    $region73: #{tpu_custom_call.1} parent=1 // pred_fallthru
      _
    // Predicated region
    $region74: #{tpu_custom_call.1} parent=1 // pred_check
      _
    $region75: #{tpu_custom_call.1} parent=1 // pred_check_branch
      %526 = sbr.rel (0) target = $region77
    $region76: #{tpu_custom_call.1} parent=1 // pred_region
      %s528 = ssub.s32 128, 128
      %529 = vsyncadd [#allocation15], %s528
      %s531 = sshll.u32 [#allocation16], 4
      %s532 = int_to_ptr.vmem [resolvable:$true] %s531
      %534 = dma.vmem_to_hbm [thread:$0]  %s532, 128, %s11, [#allocation15]
    $region77: #{tpu_custom_call.1} parent=1 // pred_fallthru
      _
    // Predicated region
    $region78: #{tpu_custom_call.1} parent=1 // pred_check
      _
    $region79: #{tpu_custom_call.1} parent=1 // pred_check_branch
      %536 = sbr.rel (0) target = $region81
    $region80: #{tpu_custom_call.1} parent=1 // pred_region
      %537 = dma.done [#allocation6], 128
    $region81: #{tpu_custom_call.1} parent=1 // pred_fallthru
      _
    // Predicated region
    $region82: #{tpu_custom_call.1} parent=1 // pred_check
      _
    $region83: #{tpu_custom_call.1} parent=1 // pred_check_branch
      %539 = sbr.rel (0) target = $region85
    $region84: #{tpu_custom_call.1} parent=1 // pred_region
      %540 = dma.done [#allocation15], 128
    $region85: #{tpu_custom_call.1} parent=1 // pred_fallthru
      _
    // Predicated region
    $region86: #{tpu_custom_call.1} parent=1 // pred_check
      _
    $region87: #{tpu_custom_call.1} parent=1 // pred_check_branch
      %542 = sbr.rel (0) target = $region89
    $region88: #{tpu_custom_call.1} parent=1 // pred_region
      %543 = dma.done [#allocation15], 128
    $region89: #{tpu_custom_call.1} parent=1 // pred_fallthru
      _
    %544 = vsyncpa [#allocation5], 1
    %545 = vsyncpa [#allocation8], 1
    %546 = vsyncpa [#allocation11], 1
    %547 = vsyncpa [#allocation6], 1
    %548 = vsyncpa [#allocation15], 1

</llo_original>
